<compile_context>
chip_gen: v6e
topology: v6e:2x2x1
jax: 0.10.0
libtpu: 0.0.40
codegen_flags: <defaults>
</compile_context>

<pallas_src>
import functools
import math

import jax
import jax.numpy as jnp
from jax import lax
from jax.experimental import pallas as pl
from jax.experimental.pallas import tpu as pltpu


_PAD_CLASS = 2 ** 30  # sentinel class for padded rows/columns (never matches a real class)


def _round_up(x, m):
    return (x + m - 1) // m * m


def _vmem_cap_bytes():
    """Physical VMEM of the attached TPU (128 MiB on v5e/v6e, 64 MiB on v7x)."""
    try:
        return int(getattr(pltpu.get_tpu_info(), "vmem_capacity_bytes", 128 << 20))
    except Exception:  # conservative default if the query is unavailable
        return 128 << 20


def _loss_kernel(scale, n_real, fnt_ref, ftile_ref, ps_ref, tc_ref, tr_ref, out_ref):
    """Masked-similarity logsumexp for one row block; writes a lane-dense partial sum.

    fnt_ref:   (Dp, Np)  normalized feature, transposed (resident, single buffer)
    ftile_ref: (tm, Dp)  normalized feature rows of this block
    ps_ref:    (tm, 1)   class-sorted positive logits of this block (f32)
    tc_ref:    (tm, 1)   class of each block row (int32)
    tr_ref:    (1, Np)   class of every sample (int32, resident)
    out_ref:   (1, 8, 128) broadcast per-block partial sum (reduced outside)
    """
    tm = ftile_ref.shape[0]

    # fs[i, m] = <fn_i, fn_m>  -- canonical (tm,Dp)@(Dp,Np) on the MXU, f32 accumulate.
    fs = lax.dot_general(ftile_ref[...], fnt_ref[...], (((1,), (0,)), ((), ())),
                         preferred_element_type=jnp.float32)          # (tm, Np)
    s_p = scale * ps_ref[...]                                         # (tm, 1)

    # Reference: same-class entries are zeroed, then entries < 1e-6 become -inf
    # logits.  Fused: an entry is a real logit iff it is cross-class and fs >= 1e-6.
    valid = jnp.logical_and(tc_ref[...] != tr_ref[...], fs >= 1e-6)   # (tm, Np)
    s_fs = scale * fs

    # Single masked row max; invalid slots carry s_p.  The diagonal (self) entry is
    # always same-class -> invalid, so the max always includes s_p (safe logsumexp).
    row_max = jnp.max(jnp.where(valid, s_fs, s_p), axis=1, keepdims=True)
    # NOTE: on v6e/v7x this exp could run in bf16 for ~2x EUP throughput; kept in
    # f32 to stay inside the reference tolerance.
    exp_fs = jnp.where(valid, jnp.exp(s_fs - row_max), 0.0)
    denom = jnp.exp(s_p - row_max) + jnp.sum(exp_fs, axis=1, keepdims=True)
    per_sample = row_max + jnp.log(denom) - s_p       # (tm, 1) = -log_softmax[:, 0]

    # Zero out padded rows (global row index >= n_real).
    row_id = pl.program_id(0) * tm + lax.broadcasted_iota(jnp.int32, (tm, 1), 0)
    per_sample = jnp.where(row_id < n_real, per_sample, 0.0)

    partial = jnp.sum(per_sample, axis=0, keepdims=True)              # (1, 1)
    out_ref[...] = jnp.broadcast_to(partial[:, :, None], (1, 8, 128))


def proxyp_loss(feature, target, proxy, scale, block_rows=None, mxu_dtype=None):
    """feature (N, D), target (N,) int, proxy (C, D) -> scalar f32 loss."""
    n, d = feature.shape

    # ---- O(N*D) prep in XLA (per review: no O(N^2) rank/sort kernel) -------------
    # F.normalize(x, dim=1, eps=1e-12) == x * rsqrt(max(sum(x^2), 1e-24))
    f32 = feature.astype(jnp.float32)
    fn = f32 * lax.rsqrt(jnp.maximum(jnp.sum(f32 * f32, axis=1, keepdims=True), 1e-24))
    p32 = proxy.astype(jnp.float32)
    pn = p32 * lax.rsqrt(jnp.maximum(jnp.sum(p32 * p32, axis=1, keepdims=True), 1e-24))
    tgt = target.astype(jnp.int32)
    posval = jnp.sum(fn * pn[tgt, :], axis=1)          # <fn_i, pn_{target_i}>  (N,)
    perm = jnp.argsort(tgt, stable=True)               # masked_select(pred.T, label) order
    pred_sel = posval[perm]                            # (N,) class-sorted positives

    # ---- generation-aware tiling / padding ---------------------------------------
    cap = _vmem_cap_bytes()
    budget = cap - max(cap // 8, 8 << 20)              # ~112 MiB v5e/v6e, ~56 MiB v7x
    if block_rows is None:
        block_rows = 256 if cap > (96 << 20) else 128  # smaller row tile on 64-MiB parts
    dp = _round_up(d, 128)                             # lane-aligned contraction dim
    np_ = _round_up(n, 128)
    tm = _round_up(min(block_rows, np_), 8)
    if tm >= 128:
        tm = _round_up(tm, 128)
    np_ = _round_up(np_, math.lcm(tm, 128))            # keep (tm, Np)/(1, Np) lane-dense
    nblk = np_ // tm

    # Inputs are not up-cast; optionally down-cast the matmul operands to bf16.
    cdtype = jnp.dtype(mxu_dtype) if mxu_dtype is not None else jnp.dtype(feature.dtype)
    fn_pad = jnp.pad(fn, ((0, np_ - n), (0, dp - d))).astype(cdtype)   # (Np, Dp)
    fn_t = fn_pad.T                                                    # (Dp, Np)
    ps_col = jnp.pad(pred_sel, (0, np_ - n)).reshape(np_, 1).astype(jnp.float32)
    t_pad = jnp.pad(tgt, (0, np_ - n), constant_values=_PAD_CLASS)
    tc = t_pad.reshape(np_, 1)
    tr = t_pad.reshape(1, np_)

    # VMEM working set: resident fn^T (single buffer) + double-buffered row tile
    # + ~5 live (tm, Np) f32/bool temporaries + small operands.  For very large N
    # on 64-MiB parts, lower block_rows (or tile the Np axis with an online
    # logsumexp) to stay under budget.
    itemsize = jnp.dtype(cdtype).itemsize
    est = (itemsize * (np_ * dp + 2 * tm * dp)
           + 4 * (5 * tm * np_ + np_)
           + (4 << 20))
    vlim = int(min(max(est, 16 << 20), budget))

    kernel = functools.partial(_loss_kernel, float(scale), n)
    partials = pl.pallas_call(
        kernel,
        out_shape=jax.ShapeDtypeStruct((nblk, 8, 128), jnp.float32),
        grid=(nblk,),
        in_specs=[
            # Resident transposed feature (RHS): block index never changes ->
            # single buffer (review item: don't double-buffer constant inputs).
            pl.BlockSpec((dp, np_), lambda b: (0, 0),
                         pipeline_mode=pl.Buffered(buffer_count=1)),
            pl.BlockSpec((tm, dp), lambda b: (b, 0)),      # row tile (LHS stream)
            pl.BlockSpec((tm, 1), lambda b: (b, 0)),       # sorted positive logits
            pl.BlockSpec((tm, 1), lambda b: (b, 0)),       # class of tile rows
            pl.BlockSpec((1, np_), lambda b: (0, 0),       # class of all samples
                         pipeline_mode=pl.Buffered(buffer_count=1)),
        ],
        out_specs=pl.BlockSpec((1, 8, 128), lambda b: (b, 0, 0)),
        compiler_params=pltpu.CompilerParams(
            dimension_semantics=("parallel",),
            vmem_limit_bytes=vlim),
    )(fn_t, fn_pad, ps_col, tc, tr)

    return jnp.sum(partials[:, 0, 0]) / n


def _ref_loss(feature, target, proxy, scale):
    """Pure-JAX reference mirroring the PyTorch forward exactly."""
    fn = feature / jnp.maximum(jnp.linalg.norm(feature, axis=1, keepdims=True), 1e-12)
    pn = proxy / jnp.maximum(jnp.linalg.norm(proxy, axis=1, keepdims=True), 1e-12)
    pred = fn @ pn.T
    perm = jnp.argsort(target, stable=True)      # masked_select row-major order
    pred_sel = pred[perm, target[perm]][:, None]
    fs = fn @ fn.T
    same = target[:, None] == target[None, :]
    fs = jnp.where(same, 0.0, fs)
    fs = jnp.where(fs < 1e-6, -jnp.inf, fs)
    logits = scale * jnp.concatenate([pred_sel, fs], axis=1)
    logp = jax.nn.log_softmax(logits, axis=1)
    return -jnp.mean(logp[:, 0])


if __name__ == "__main__":
    # Module config (deterministic, in-script): num_classes=4, scale=16.0
    D, C = 32, 4
    scale = 16.0
    key = jax.random.PRNGKey(0)
    kf, kp, kt = jax.random.split(key, 3)
    proxy = jax.random.normal(kp, (C, D), dtype=jnp.float32)

    # Case 1 (jitted): N=13 with an 8-row tile -> multi-block grid, exercises
    # N padding, sentinel-class masking, and the padded-row zeroing.
    N = 13
    feature = jax.random.normal(kf, (N, D), dtype=jnp.float32)
    target = jax.random.randint(kt, (N,), 0, C, dtype=jnp.int32)
    loss_fn = jax.jit(functools.partial(proxyp_loss, scale=scale, block_rows=8))
    loss = jax.block_until_ready(loss_fn(feature, target, proxy))
    ref = jax.block_until_ready(_ref_loss(feature, target, proxy, scale))
    assert jnp.isfinite(loss), loss
    assert jnp.allclose(loss, ref, rtol=1e-3, atol=1e-3), (loss, ref)

    # Case 2 (eager): N=8, default tile -> single-block path.
    N2 = 8
    feature2 = jax.random.normal(kf, (N2, D), dtype=jnp.float32)
    target2 = jax.random.randint(kt, (N2,), 0, C, dtype=jnp.int32)
    loss2 = jax.block_until_ready(proxyp_loss(feature2, target2, proxy, scale))
    ref2 = jax.block_until_ready(_ref_loss(feature2, target2, proxy, scale))
    assert jnp.isfinite(loss2), loss2
    assert jnp.allclose(loss2, ref2, rtol=1e-3, atol=1e-3), (loss2, ref2)

    # Case 3: opt-in bf16 MXU operands for f32 inputs (full MXU rate on all
    # generations).  The hard fs >= 1e-6 threshold can flip near the boundary in
    # bf16, so only sanity-check this path.
    loss3 = jax.block_until_ready(
        proxyp_loss(feature, target, proxy, scale, mxu_dtype=jnp.bfloat16))
    assert jnp.isfinite(loss3), loss3

    print("KERNEL_OK")
</pallas_src>

<mosaic_0001>
module attributes {stable_mosaic.version = 11 : i64} {
  func.func @_loss_kernel(%arg0: i32, %arg1: memref<128x128xf32, #tpu.memory_space<vmem>>, %arg2: memref<8x128xf32, #tpu.memory_space<vmem>>, %arg3: memref<8x1xf32, #tpu.memory_space<vmem>>, %arg4: memref<8x1xi32, #tpu.memory_space<vmem>>, %arg5: memref<1x128xi32, #tpu.memory_space<vmem>>, %arg6: memref<1x8x128xf32, #tpu.memory_space<vmem>>) attributes {dimension_semantics = [#tpu.dimension_semantics<parallel>], iteration_bounds = array<i64: 16>, scalar_prefetch = 0 : i64, scratch_operands = 0 : i64, tpu.core_type = #tpu.core_type<tc>, window_params = [{pipeline_mode = #tpu.pipeline_mode<synchronous>, transform_indices = @transform_0, window_bounds = array<i64: 128, 128>}, {transform_indices = @transform_1, window_bounds = array<i64: 8, 128>}, {transform_indices = @transform_2, window_bounds = array<i64: 8, 1>}, {transform_indices = @transform_3, window_bounds = array<i64: 8, 1>}, {pipeline_mode = #tpu.pipeline_mode<synchronous>, transform_indices = @transform_4, window_bounds = array<i64: 1, 128>}, {transform_indices = @transform_5, window_bounds = array<i64: 1, 8, 128>}]} {
    %c0 = arith.constant 0 : index
    %c0_0 = arith.constant 0 : index
    %0 = vector.load %arg2[%c0, %c0_0] : memref<8x128xf32, #tpu.memory_space<vmem>>, vector<8x128xf32>
    %c0_1 = arith.constant 0 : index
    %c0_2 = arith.constant 0 : index
    %1 = vector.load %arg1[%c0_1, %c0_2] : memref<128x128xf32, #tpu.memory_space<vmem>>, vector<128x128xf32>
    %cst = arith.constant dense<0.000000e+00> : vector<8x128xf32>
    %2 = tpu.matmul %0, %1, %cst {dimension_numbers = #tpu.dot_dimension_numbers<[1], [0], [0], [1], [0, 0, 1, 1], [], []>} : vector<8x128xf32>, vector<128x128xf32>, vector<8x128xf32> -> vector<8x128xf32>
    %c0_3 = arith.constant 0 : index
    %c0_4 = arith.constant 0 : index
    %3 = vector.load %arg3[%c0_3, %c0_4] : memref<8x1xf32, #tpu.memory_space<vmem>>, vector<8x1xf32>
    %cst_5 = arith.constant 1.600000e+01 : f32
    %4 = vector.broadcast %cst_5 : f32 to vector<8x1xf32>
    %5 = arith.mulf %4, %3 : vector<8x1xf32>
    %c0_6 = arith.constant 0 : index
    %c0_7 = arith.constant 0 : index
    %6 = vector.load %arg4[%c0_6, %c0_7] : memref<8x1xi32, #tpu.memory_space<vmem>>, vector<8x1xi32>
    %c0_8 = arith.constant 0 : index
    %c0_9 = arith.constant 0 : index
    %7 = vector.load %arg5[%c0_8, %c0_9] : memref<1x128xi32, #tpu.memory_space<vmem>>, vector<1x128xi32>
    %8 = vector.broadcast %6 : vector<8x1xi32> to vector<8x128xi32>
    %9 = vector.broadcast %7 : vector<1x128xi32> to vector<8x128xi32>
    %10 = arith.cmpi ne, %8, %9 : vector<8x128xi32>
    %cst_10 = arith.constant 9.99999997E-7 : f32
    %11 = vector.broadcast %cst_10 : f32 to vector<8x128xf32>
    %12 = arith.cmpf oge, %2, %11 : vector<8x128xf32>
    %13 = arith.andi %10, %12 : vector<8x128xi1>
    %cst_11 = arith.constant 1.600000e+01 : f32
    %14 = vector.broadcast %cst_11 : f32 to vector<8x128xf32>
    %15 = arith.mulf %14, %2 : vector<8x128xf32>
    %16 = vector.shape_cast %5 : vector<8x1xf32> to vector<8x1xf32>
    %17 = vector.broadcast %16 : vector<8x1xf32> to vector<8x128xf32>
    %18 = arith.select %13, %15, %17 : vector<8x128xi1>, vector<8x128xf32>
    %cst_12 = arith.constant dense<0xFF800000> : vector<8xf32>
    %19 = vector.multi_reduction <maximumf>, %18, %cst_12 [1] : vector<8x128xf32> to vector<8xf32>
    %20 = vector.shape_cast %19 : vector<8xf32> to vector<8x1xf32>
    %21 = vector.broadcast %20 : vector<8x1xf32> to vector<8x128xf32>
    %22 = arith.subf %15, %21 : vector<8x128xf32>
    %23 = math.exp %22 : vector<8x128xf32>
    %cst_13 = arith.constant 0.000000e+00 : f32
    %24 = vector.broadcast %cst_13 : f32 to vector<8x128xf32>
    %25 = arith.select %13, %23, %24 : vector<8x128xi1>, vector<8x128xf32>
    %26 = arith.subf %5, %20 : vector<8x1xf32>
    %27 = math.exp %26 : vector<8x1xf32>
    %cst_14 = arith.constant dense<0.000000e+00> : vector<8xf32>
    %28 = vector.multi_reduction <add>, %25, %cst_14 [1] : vector<8x128xf32> to vector<8xf32>
    %29 = vector.shape_cast %28 : vector<8xf32> to vector<8x1xf32>
    %30 = arith.addf %27, %29 : vector<8x1xf32>
    %31 = math.log %30 : vector<8x1xf32>
    %32 = arith.addf %20, %31 : vector<8x1xf32>
    %33 = arith.subf %32, %5 : vector<8x1xf32>
    %c8_i32 = arith.constant 8 : i32
    %34 = arith.muli %arg0, %c8_i32 : i32
    %35 = tpu.iota {dimensions = array<i32: 0>} : vector<8x1xi32>
    %36 = vector.broadcast %34 : i32 to vector<8x1xi32>
    %37 = arith.addi %36, %35 : vector<8x1xi32>
    %c13_i32 = arith.constant 13 : i32
    %38 = vector.broadcast %c13_i32 : i32 to vector<8x1xi32>
    %39 = arith.cmpi slt, %37, %38 : vector<8x1xi32>
    %cst_15 = arith.constant 0.000000e+00 : f32
    %40 = vector.broadcast %cst_15 : f32 to vector<8x1xf32>
    %41 = arith.select %39, %33, %40 : vector<8x1xi1>, vector<8x1xf32>
    %cst_16 = arith.constant dense<0.000000e+00> : vector<1xf32>
    %42 = vector.multi_reduction <add>, %41, %cst_16 [0] : vector<8x1xf32> to vector<1xf32>
    %43 = vector.shape_cast %42 : vector<1xf32> to vector<1x1xf32>
    %44 = vector.shape_cast %43 : vector<1x1xf32> to vector<1x1x1xf32>
    %45 = vector.shape_cast %44 : vector<1x1x1xf32> to vector<1x1x1xf32>
    %46 = vector.broadcast %45 : vector<1x1x1xf32> to vector<1x8x128xf32>
    %c0_17 = arith.constant 0 : index
    %c0_18 = arith.constant 0 : index
    %c0_19 = arith.constant 0 : index
    %47 = vector.load %arg6[%c0_17, %c0_18, %c0_19] : memref<1x8x128xf32, #tpu.memory_space<vmem>>, vector<1x8x128xf32>
    tpu.vector_store %arg6[%c0_17, %c0_18, %c0_19], %46 {strides = array<i32>} : memref<1x8x128xf32, #tpu.memory_space<vmem>>, vector<1x8x128xf32>,
    return
  }
  func.func @transform_0(%arg0: i32) -> (i32, i32) {
    %c0_i32 = arith.constant 0 : i32
    %c0_i32_0 = arith.constant 0 : i32
    %c0_i32_1 = arith.constant 0 : i32
    return %c0_i32, %c0_i32_0 : i32, i32
  }
  func.func @transform_1(%arg0: i32) -> (i32, i32) {
    %c0_i32 = arith.constant 0 : i32
    %c0_i32_0 = arith.constant 0 : i32
    return %arg0, %c0_i32 : i32, i32
  }
  func.func @transform_2(%arg0: i32) -> (i32, i32) {
    %c0_i32 = arith.constant 0 : i32
    %c0_i32_0 = arith.constant 0 : i32
    return %arg0, %c0_i32 : i32, i32
  }
  func.func @transform_3(%arg0: i32) -> (i32, i32) {
    %c0_i32 = arith.constant 0 : i32
    %c0_i32_0 = arith.constant 0 : i32
    return %arg0, %c0_i32 : i32, i32
  }
  func.func @transform_4(%arg0: i32) -> (i32, i32) {
    %c0_i32 = arith.constant 0 : i32
    %c0_i32_0 = arith.constant 0 : i32
    %c0_i32_1 = arith.constant 0 : i32
    return %c0_i32, %c0_i32_0 : i32, i32
  }
  func.func @transform_5(%arg0: i32) -> (i32, i32, i32) {
    %c0_i32 = arith.constant 0 : i32
    %c0_i32_0 = arith.constant 0 : i32
    %c0_i32_1 = arith.constant 0 : i32
    return %arg0, %c0_i32, %c0_i32_0 : i32, i32, i32
  }
}

</mosaic_0001>

<llo_original>
// kernel: proxyp_loss.1
$region0: #{proxyp_loss.1}
  #allocation0 [shape = 'u32[]', space=smem, size = 0x4, offset = 0x4, fixed_abs, tag = 'smem constant byte address 0x4 - core index']
  #allocation1 [shape = 'u32[144,128]{1,0:T(1,128)}', space=vmem, size = 0x12000, scoped, tag = 'internal scratch']
  %s0 = inlined_call_operand.vmem [shape: f32[128,128], index: 0, kind: input, shape index: {}]
  %s1 = inlined_call_operand.vmem [shape: f32[128,128], index: 1, kind: input, shape index: {}]
  %s2 = inlined_call_operand.vmem [shape: f32[128,1], index: 2, kind: input, shape index: {}]
  %s3 = inlined_call_operand.vmem [shape: s32[128,1], index: 3, kind: input, shape index: {}]
  %s4 = inlined_call_operand.vmem [shape: s32[1,128], index: 4, kind: input, shape index: {}]
  %s5 = inlined_call_operand.vmem [shape: f32[16,8,128], index: 5, kind: output, shape index: {}]
  %s6 = sld [smem:[#allocation0]]
  $region53: #{proxyp_loss.1} parent=0
    _
  %s8 = ssub.s32 1, %s6
  %s9 = scalar_select 0, %s8, %s6
  loop: start=0, step=1, limit=18
  $region2: #{proxyp_loss.1} parent=0 // loop_pre_header
    _
  $region3: #{proxyp_loss.1} parent=0 // loop_header
    %s11 = sphi 0, %s15
    %p12 = scmp.ge.s32.totalorder %s11, 18
    %s19 = sphi 0, %s19
    %s21 = sphi 0, %s19
    %s22 = sphi 0, %s21
    %s36 = sphi 0, %s22
    %s42 = sphi 0, %s44
    %s45 = sphi 0, %s42
    %s46 = sphi 0, %s45
    %s62 = sphi 0, %s46
    %s68 = sphi 0, %s70
    %s71 = sphi 0, %s68
    %s72 = sphi 0, %s71
    %s88 = sphi 0, %s72
    %s94 = sphi 0, %s96
    %s97 = sphi 0, %s94
    %s98 = sphi 0, %s97
    %s114 = sphi 0, %s98
    %s118 = sphi 0, %s118
    %s120 = sphi 0, %s118
    %s121 = sphi 0, %s120
    %s135 = sphi 0, %s121
    %s141 = sphi 0, %s143
    %s144 = sphi 0, %s141
    %s145 = sphi 0, %s144
    %s161 = sphi 0, %s145
  $region4: #{proxyp_loss.1} parent=0 // loop_header_branch
    %14 = sbr.rel (%p12) target = $region8
  $region5: #{proxyp_loss.1} parent=0 // loop_body
    %s16 = ssub.s32 %s11, 1
    %s17 = ssub.s32 %s11, 2
    %s18 = sadd.s32 %s11, 1
    %s20 = sadd.s32 %s19, 1
    %p23 = scmp.eq.s32.totalorder %s11, 15
    %p24 = scmp.ne.s32.totalorder %s19, %s21
    %p25 = scmp.eq.s32.totalorder %s11, 0
    %p26 = por %p24, %p25
    %p27 = scmp.ne.s32.totalorder %s19, %s21
    %p28 = scmp.eq.s32.totalorder %s16, 15
    %p29 = por %p27, %p28
    %p30 = scmp.ne.s32.totalorder %s21, %s22
    %p31 = scmp.eq.s32.totalorder %s16, 0
    %p32 = por %p30, %p31
    %p33 = scmp.ne.s32.totalorder %s21, %s22
    %p34 = scmp.eq.s32.totalorder %s17, 15
    %p35 = por %p33, %p34
    %p37 = scmp.ne.s32.totalorder %s22, %s36
    %p38 = scmp.eq.s32.totalorder %s17, 0
    %p39 = por %p37, %p38
    %s40 = ssub.s32 %s11, %s18
    %p41 = scmp.eq.s32.totalorder %s40, 0
    %s43 = sadd.s32 %s42, 1
    %s44 = scalar_select %p41, %s42, %s43
    %p47 = pneg %p41
    %p48 = scmp.eq.s32.totalorder %s11, 15
    %p49 = por %p47, %p48
    %p50 = scmp.ne.s32.totalorder %s42, %s45
    %p51 = scmp.eq.s32.totalorder %s11, 0
    %p52 = por %p50, %p51
    %p53 = scmp.ne.s32.totalorder %s42, %s45
    %p54 = scmp.eq.s32.totalorder %s16, 15
    %p55 = por %p53, %p54
    %p56 = scmp.ne.s32.totalorder %s45, %s46
    %p57 = scmp.eq.s32.totalorder %s16, 0
    %p58 = por %p56, %p57
    %p59 = scmp.ne.s32.totalorder %s45, %s46
    %p60 = scmp.eq.s32.totalorder %s17, 15
    %p61 = por %p59, %p60
    %p63 = scmp.ne.s32.totalorder %s46, %s62
    %p64 = scmp.eq.s32.totalorder %s17, 0
    %p65 = por %p63, %p64
    %s66 = ssub.s32 %s11, %s18
    %p67 = scmp.eq.s32.totalorder %s66, 0
    %s69 = sadd.s32 %s68, 1
    %s70 = scalar_select %p67, %s68, %s69
    %p73 = pneg %p67
    %p74 = scmp.eq.s32.totalorder %s11, 15
    %p75 = por %p73, %p74
    %p76 = scmp.ne.s32.totalorder %s68, %s71
    %p77 = scmp.eq.s32.totalorder %s11, 0
    %p78 = por %p76, %p77
    %p79 = scmp.ne.s32.totalorder %s68, %s71
    %p80 = scmp.eq.s32.totalorder %s16, 15
    %p81 = por %p79, %p80
    %p82 = scmp.ne.s32.totalorder %s71, %s72
    %p83 = scmp.eq.s32.totalorder %s16, 0
    %p84 = por %p82, %p83
    %p85 = scmp.ne.s32.totalorder %s71, %s72
    %p86 = scmp.eq.s32.totalorder %s17, 15
    %p87 = por %p85, %p86
    %p89 = scmp.ne.s32.totalorder %s72, %s88
    %p90 = scmp.eq.s32.totalorder %s17, 0
    %p91 = por %p89, %p90
    %s92 = ssub.s32 %s11, %s18
    %p93 = scmp.eq.s32.totalorder %s92, 0
    %s95 = sadd.s32 %s94, 1
    %s96 = scalar_select %p93, %s94, %s95
    %p99 = pneg %p93
    %p100 = scmp.eq.s32.totalorder %s11, 15
    %p101 = por %p99, %p100
    %p102 = scmp.ne.s32.totalorder %s94, %s97
    %p103 = scmp.eq.s32.totalorder %s11, 0
    %p104 = por %p102, %p103
    %p105 = scmp.ne.s32.totalorder %s94, %s97
    %p106 = scmp.eq.s32.totalorder %s16, 15
    %p107 = por %p105, %p106
    %p108 = scmp.ne.s32.totalorder %s97, %s98
    %p109 = scmp.eq.s32.totalorder %s16, 0
    %p110 = por %p108, %p109
    %p111 = scmp.ne.s32.totalorder %s97, %s98
    %p112 = scmp.eq.s32.totalorder %s17, 15
    %p113 = por %p111, %p112
    %p115 = scmp.ne.s32.totalorder %s98, %s114
    %p116 = scmp.eq.s32.totalorder %s17, 0
    %p117 = por %p115, %p116
    %s119 = sadd.s32 %s118, 1
    %p122 = scmp.eq.s32.totalorder %s11, 15
    %p123 = scmp.ne.s32.totalorder %s118, %s120
    %p124 = scmp.eq.s32.totalorder %s11, 0
    %p125 = por %p123, %p124
    %p126 = scmp.ne.s32.totalorder %s118, %s120
    %p127 = scmp.eq.s32.totalorder %s16, 15
    %p128 = por %p126, %p127
    %p129 = scmp.ne.s32.totalorder %s120, %s121
    %p130 = scmp.eq.s32.totalorder %s16, 0
    %p131 = por %p129, %p130
    %p132 = scmp.ne.s32.totalorder %s120, %s121
    %p133 = scmp.eq.s32.totalorder %s17, 15
    %p134 = por %p132, %p133
    %p136 = scmp.ne.s32.totalorder %s121, %s135
    %p137 = scmp.eq.s32.totalorder %s17, 0
    %p138 = por %p136, %p137
    %s139 = ssub.s32 %s11, %s18
    %p140 = scmp.eq.s32.totalorder %s139, 0
    %s142 = sadd.s32 %s141, 1
    %s143 = scalar_select %p140, %s141, %s142
    %p146 = pneg %p140
    %p147 = scmp.eq.s32.totalorder %s11, 15
    %p148 = por %p146, %p147
    %p149 = scmp.ne.s32.totalorder %s141, %s144
    %p150 = scmp.eq.s32.totalorder %s11, 0
    %p151 = por %p149, %p150
    %p152 = scmp.ne.s32.totalorder %s141, %s144
    %p153 = scmp.eq.s32.totalorder %s16, 15
    %p154 = por %p152, %p153
    %p155 = scmp.ne.s32.totalorder %s144, %s145
    %p156 = scmp.eq.s32.totalorder %s16, 0
    %p157 = por %p155, %p156
    %p158 = scmp.ne.s32.totalorder %s144, %s145
    %p159 = scmp.eq.s32.totalorder %s17, 15
    %p160 = por %p158, %p159
    %p162 = scmp.ne.s32.totalorder %s145, %s161
    %p163 = scmp.eq.s32.totalorder %s17, 0
    %p164 = por %p162, %p163
    %p165 = scmp.le.s32.totalorder 1, %s11
    %p166 = scmp.lt.s32.totalorder %s11, 17
    %p167 = pnand %p165, %p166
    %p168 = pneg %p167
    // Predicated region
    $region9: #{proxyp_loss.1} parent=5 // pred_check
      _
    $region10: #{proxyp_loss.1} parent=5 // pred_check_branch
      %170 = sbr.rel (%p167) target = $region12
    $region11: #{proxyp_loss.1} parent=5 // pred_region
      %s171 = ssub.s32 %s11, 1
      // Predicated region
      $region13: #{proxyp_loss.1} parent=11 // pred_check
        %p172 = pneg %p32
      $region14: #{proxyp_loss.1} parent=11 // pred_check_branch
        %174 = sbr.rel (%p172) target = $region16
      $region15: #{proxyp_loss.1} parent=11 // pred_region
        _
      $region16: #{proxyp_loss.1} parent=11 // pred_fallthru
        _
      // Predicated region
      $region17: #{proxyp_loss.1} parent=11 // pred_check
        %p175 = pneg %p131
      $region18: #{proxyp_loss.1} parent=11 // pred_check_branch
        %177 = sbr.rel (%p175) target = $region20
      $region19: #{proxyp_loss.1} parent=11 // pred_region
        _
      $region20: #{proxyp_loss.1} parent=11 // pred_fallthru
        _
    $region12: #{proxyp_loss.1} parent=5 // pred_fallthru
      _
    %p178 = scmp.lt.s32.totalorder %s11, 16
    // Predicated region
    $region21: #{proxyp_loss.1} parent=5 // pred_check
      %p179 = pneg %p178
    $region22: #{proxyp_loss.1} parent=5 // pred_check_branch
      %181 = sbr.rel (%p179) target = $region24
    $region23: #{proxyp_loss.1} parent=5 // pred_region
      // Predicated region
      $region25: #{proxyp_loss.1} parent=23 // pred_check
        %p182 = pneg %p52
      $region26: #{proxyp_loss.1} parent=23 // pred_check_branch
        %184 = sbr.rel (%p182) target = $region28
      $region27: #{proxyp_loss.1} parent=23 // pred_region
        %p185 = scmp.lt.s32.totalorder %s11, 15
        %s186 = scalar_select %p185, %s11, 15
        %s187 = smul.addr %s186, 8
        %s188 = scalar_lea.vmem %s1, %s187
      $region28: #{proxyp_loss.1} parent=23 // pred_fallthru
        _
      // Predicated region
      $region29: #{proxyp_loss.1} parent=23 // pred_check
        %p189 = pneg %p78
      $region30: #{proxyp_loss.1} parent=23 // pred_check_branch
        %191 = sbr.rel (%p189) target = $region32
      $region31: #{proxyp_loss.1} parent=23 // pred_region
        %p192 = scmp.lt.s32.totalorder %s11, 15
        %s193 = scalar_select %p192, %s11, 15
        %s194 = smul.addr %s193, 8
        %s195 = scalar_lea.vmem %s2, %s194
      $region32: #{proxyp_loss.1} parent=23 // pred_fallthru
        _
      // Predicated region
      $region33: #{proxyp_loss.1} parent=23 // pred_check
        %p196 = pneg %p104
      $region34: #{proxyp_loss.1} parent=23 // pred_check_branch
        %198 = sbr.rel (%p196) target = $region36
      $region35: #{proxyp_loss.1} parent=23 // pred_region
        %p199 = scmp.lt.s32.totalorder %s11, 15
        %s200 = scalar_select %p199, %s11, 15
        %s201 = smul.addr %s200, 8
        %s202 = scalar_lea.vmem %s3, %s201
      $region36: #{proxyp_loss.1} parent=23 // pred_fallthru
        _
    $region24: #{proxyp_loss.1} parent=5 // pred_fallthru
      _
    %p203 = scmp.le.s32.totalorder 1, %s11
    %p204 = scmp.lt.s32.totalorder %s11, 17
    %p205 = pnand %p203, %p204
    %p206 = pneg %p205
    // Predicated region
    $region37: #{proxyp_loss.1} parent=5 // pred_check
      _
    $region38: #{proxyp_loss.1} parent=5 // pred_check_branch
      %208 = sbr.rel (%p205) target = $region40
    $region39: #{proxyp_loss.1} parent=5 // pred_region
      %s209 = ssub.s32 %s11, 1
      %p210 = pneg %p32
      %p211 = pneg %p29
      %p212 = scmp.lt.s32.totalorder %s16, 15
      %s213 = scalar_select %p212, %s16, 15
      %s214 = smul.addr %s213, 8
      %s215 = scalar_lea.vmem %s1, %s214
      %p216 = pneg %p58
      %p217 = pneg %p55
      %p218 = scmp.lt.s32.totalorder %s16, 15
      %s219 = scalar_select %p218, %s16, 15
      %s220 = smul.addr %s219, 8
      %s221 = scalar_lea.vmem %s2, %s220
      %p222 = pneg %p84
      %p223 = pneg %p81
      %p224 = scmp.lt.s32.totalorder %s16, 15
      %s225 = scalar_select %p224, %s16, 15
      %s226 = smul.addr %s225, 8
      %s227 = scalar_lea.vmem %s3, %s226
      %p228 = pneg %p110
      %p229 = pneg %p107
      %p230 = pneg %p131
      %p231 = pneg %p128
      %p232 = pneg %p157
      %p233 = pneg %p154
      %p234 = scmp.lt.s32.totalorder %s16, 15
      %s235 = scalar_select %p234, %s16, 15
      %s236 = smul.addr %s235, 8
      %s237 = scalar_lea.vmem %s5, %s236
      %p238 = scmp.lt.s32.totalorder %s16, 15
      %s239 = scalar_select %p238, %s16, 15
      %s240 = smul.addr %s239, 8
      %s241 = scalar_lea.vmem %s1, %s240
      %p242 = scmp.lt.s32.totalorder %s16, 15
      %s243 = scalar_select %p242, %s16, 15
      %s244 = smul.addr %s243, 8
      %s245 = scalar_lea.vmem %s2, %s244
      %p246 = scmp.lt.s32.totalorder %s16, 15
      %s247 = scalar_select %p246, %s16, 15
      %s248 = smul.addr %s247, 8
      %s249 = scalar_lea.vmem %s3, %s248
      %p250 = scmp.lt.s32.totalorder %s16, 15
      %s251 = scalar_select %p250, %s16, 15
      %s252 = smul.addr %s251, 8
      %s253 = scalar_lea.vmem %s5, %s252
      %v254 = vld [vmem:[%s241] sm:$0xff]
      %v255 = vld [vmem:[%s0] sm:$0xff]
      %v256 = vld [vmem:[%s0 + $0x8] sm:$0xff]
      %v257 = vld [vmem:[%s0 + $0x10] sm:$0xff]
      %v258 = vld [vmem:[%s0 + $0x18] sm:$0xff]
      %v259 = vld [vmem:[%s0 + $0x20] sm:$0xff]
      %v260 = vld [vmem:[%s0 + $0x28] sm:$0xff]
      %v261 = vld [vmem:[%s0 + $0x30] sm:$0xff]
      %v262 = vld [vmem:[%s0 + $0x38] sm:$0xff]
      %v263 = vld [vmem:[%s0 + $0x40] sm:$0xff]
      %v264 = vld [vmem:[%s0 + $0x48] sm:$0xff]
      %v265 = vld [vmem:[%s0 + $0x50] sm:$0xff]
      %v266 = vld [vmem:[%s0 + $0x58] sm:$0xff]
      %v267 = vld [vmem:[%s0 + $0x60] sm:$0xff]
      %v268 = vld [vmem:[%s0 + $0x68] sm:$0xff]
      %v269 = vld [vmem:[%s0 + $0x70] sm:$0xff]
      %v270 = vld [vmem:[%s0 + $0x78] sm:$0xff]
      %271 = vmatprep.subr.mxu0 0.0
      %272 = vmatpush1.msra.mxu0 %v270
      %273 = vmatprep.subr.mxu0 0.0
      %274 = vmatpush1.msra.mxu0 %v269
      %275 = vmatprep.subr.mxu0 0.0
      %276 = vmatpush1.msra.mxu0 %v268
      %277 = vmatprep.subr.mxu0 0.0
      %278 = vmatpush1.msra.mxu0 %v267
      %279 = vmatprep.subr.mxu0 0.0
      %280 = vmatpush1.msra.mxu0 %v266
      %281 = vmatprep.subr.mxu0 0.0
      %282 = vmatpush1.msra.mxu0 %v265
      %283 = vmatprep.subr.mxu0 0.0
      %284 = vmatpush1.msra.mxu0 %v264
      %285 = vmatprep.subr.mxu0 0.0
      %286 = vmatpush1.msra.mxu0 %v263
      %287 = vmatprep.subr.mxu0 0.0
      %288 = vmatpush1.msra.mxu0 %v262
      %289 = vmatprep.subr.mxu0 0.0
      %290 = vmatpush1.msra.mxu0 %v261
      %291 = vmatprep.subr.mxu0 0.0
      %292 = vmatpush1.msra.mxu0 %v260
      %293 = vmatprep.subr.mxu0 0.0
      %294 = vmatpush1.msra.mxu0 %v259
      %295 = vmatprep.subr.mxu0 0.0
      %296 = vmatpush1.msra.mxu0 %v258
      %297 = vmatprep.subr.mxu0 0.0
      %298 = vmatpush1.msra.mxu0 %v257
      %299 = vmatprep.subr.mxu0 0.0
      %300 = vmatpush1.msra.mxu0 %v256
      %301 = vmatprep.subr.mxu0 0.0
      %302 = vmatpush1.msra.mxu0 %v255
      %303 = vmatprep.subr.mxu0 0.0
      %304 = vmatpush2.msra.mxu0 0.0
      %305 = vmatprep.subr.mxu0 0.0
      %306 = vmatpush2.msra.mxu0 0.0
      %307 = vmatprep.subr.mxu0 0.0
      %308 = vmatpush2.msra.mxu0 0.0
      %309 = vmatprep.subr.mxu0 0.0
      %310 = vmatpush2.msra.mxu0 0.0
      %311 = vmatprep.subr.mxu0 0.0
      %312 = vmatpush2.msra.mxu0 0.0
      %313 = vmatprep.subr.mxu0 0.0
      %314 = vmatpush2.msra.mxu0 0.0
      %315 = vmatprep.subr.mxu0 0.0
      %316 = vmatpush2.msra.mxu0 0.0
      %317 = vmatprep.subr.mxu0 0.0
      %318 = vmatpush2.msra.mxu0 0.0
      %319 = vmatprep.subr.mxu0 0.0
      %320 = vmatpush2.msra.mxu0 0.0
      %321 = vmatprep.subr.mxu0 0.0
      %322 = vmatpush2.msra.mxu0 0.0
      %323 = vmatprep.subr.mxu0 0.0
      %324 = vmatpush2.msra.mxu0 0.0
      %325 = vmatprep.subr.mxu0 0.0
      %326 = vmatpush2.msra.mxu0 0.0
      %327 = vmatprep.subr.mxu0 0.0
      %328 = vmatpush2.msra.mxu0 0.0
      %329 = vmatprep.subr.mxu0 0.0
      %330 = vmatpush2.msra.mxu0 0.0
      %331 = vmatprep.subr.mxu0 0.0
      %332 = vmatpush2.msra.mxu0 0.0
      %333 = vmatprep.subr.mxu0 0.0
      %334 = vmatpush2.msra.mxu0 0.0
      %335 = vmatprep.mubr.f32.mxu0 0.0
      %336 = vmatmul.mubr.f32.gmra.mxu0 %v254
      %v337 = vpop.f32.mrf.mxu0
      %v338 = vadd.f32 0.0, %v337
      %v339 = vpop.f32.mrf.mxu0
      %340 = vdwg.mxu0
      %v341 = vld [vmem:[%s245] sm:$0xff]
      %v342 = vmul.f32 %v341, 16.0
      %v343 = vld [vmem:[%s249] sm:$0xff]
      %v344 = vld [vmem:[%s4] sm:$0x1]
      %345 = vset.pattern.permute.xlu0 0
      %346 = vperm.xlu0 %345, %v343
      %v347 = vpop.permute.xlu0 %346
      %v348 = vlaneseq
      %v349 = vshrl.u32 %v348, 7
      %v350 = vsub.s32 0, %v349
      %v351 = vrot.slane %v344, %v350
      %vm352 = vcmp.ne.s32.totalorder %v347, %v351
      %vm353 = vcmp.ge.f32.partialorder %v338, 1e-06
      %vm354 = vmand %vm352, %vm353
      %v355 = vmul.f32 %v338, 16.0
      %357 = vset.pattern.permute.xlu0 0
      %358 = vperm.xlu0 %357, %v342
      %v359 = vpop.permute.xlu0 %358
      %v361 = vsel %vm354, %v355, %v359
      %362 = vmax.xlane.f32.xlu0 %v361
      %v363 = vpop.xlane.xlu0 %362
      %v364 = vsub.f32 %v355, %v363
      %v365 = vmul.f32 %v364, 1.442695
      %v366 = vpow.pop %v365
      %v367 = vsel %vm354, %v366, 0.0
      %v368 = vsub.f32 %v342, %v363
      %v369 = vmul.f32 %v368, 1.442695
      %v370 = vpow.pop %v369
      %371 = vadd.xlane.f32.xlu0 %v367
      %v372 = vpop.xlane.xlu0 %371
      %v373 = vadd.f32 %v370, %v372
      %v374 = vlog2.pop %v373
      %v375 = vmul.f32 %v374, 0.6931472
      %v376 = vadd.f32 %v363, %v375
      %v377 = vsub.f32 %v376, %v342
      %s378 = smul.u32 %s16, 8
      %v379 = vlaneseq
      %v380 = vshrl.u32 %v379, 7
      %v381 = vstv %s378
      %v382 = vadd.s32 %v381, %v380
      %vm383 = vcmp.lt.s32.totalorder %v382, 13
      %v384 = vsel %vm383, %v377, 0.0
      %vm385 = vcmask 7168
      %v386 = vsel %vm385, %v384, 0.0
      %v387 = vrot.slane %v386, 4
      %v388 = vadd.f32 %v386, %v387
      %v389 = vrot.slane %v388, 2
      %v390 = vadd.f32 %v388, %v389
      %v391 = vrot.slane %v390, 1
      %v392 = vadd.f32 %v390, %v391
      %394 = vset.pattern.permute.xlu0 0
      %395 = vperm.xlu0 %394, %v392
      %v396 = vpop.permute.xlu0 %395
      %398 = vst [vmem:[%s253] sm:$0xff] %v396
      %p399 = scmp.lt.s32.totalorder %s16, 15
      %s400 = scalar_select %p399, %s16, 15
      %s401 = smul.addr %s400, 8
      %s402 = scalar_lea.vmem %s5, %s401
      // Predicated region
      $region41: #{proxyp_loss.1} parent=39 // pred_check
        %p403 = pneg %p154
      $region42: #{proxyp_loss.1} parent=39 // pred_check_branch
        %405 = sbr.rel (%p403) target = $region44
      $region43: #{proxyp_loss.1} parent=39 // pred_region
        _
      $region44: #{proxyp_loss.1} parent=39 // pred_fallthru
        _
    $region40: #{proxyp_loss.1} parent=5 // pred_fallthru
      _
    %p406 = scmp.le.s32.totalorder 2, %s11
    // Predicated region
    $region45: #{proxyp_loss.1} parent=5 // pred_check
      %p407 = pneg %p406
    $region46: #{proxyp_loss.1} parent=5 // pred_check_branch
      %409 = sbr.rel (%p407) target = $region48
    $region47: #{proxyp_loss.1} parent=5 // pred_region
      %s410 = ssub.s32 %s11, 2
      // Predicated region
      $region49: #{proxyp_loss.1} parent=47 // pred_check
        %p411 = pneg %p160
      $region50: #{proxyp_loss.1} parent=47 // pred_check_branch
        %413 = sbr.rel (%p411) target = $region52
      $region51: #{proxyp_loss.1} parent=47 // pred_region
        %p414 = scmp.lt.s32.totalorder %s17, 15
        %s415 = scalar_select %p414, %s17, 15
        %s416 = smul.addr %s415, 8
        %s417 = scalar_lea.vmem %s5, %s416
      $region52: #{proxyp_loss.1} parent=47 // pred_fallthru
        _
    $region48: #{proxyp_loss.1} parent=5 // pred_fallthru
      _
  $region6: #{proxyp_loss.1} parent=0 // loop_footer
    %s15 = sadd.s32 1, %s11
  $region7: #{proxyp_loss.1} parent=0 // loop_footer_branch
    %10 = sbr.rel target = $region3
  $region8: #{proxyp_loss.1} parent=0 // loop_exit
    _

</llo_original>
